<compile_context>
chip_gen: v6e
topology: v6e:2x2x1
jax: 0.10.0
libtpu: 0.0.40
codegen_flags: <defaults>
</compile_context>

<pallas_src>
import functools

import jax
import jax.numpy as jnp
from jax.experimental import pallas as pl
from jax.experimental.pallas import tpu as pltpu


def _round_up(n, m):
    return ((n + m - 1) // m) * m


def _fm_kernel(x_ref, sel_ref, o_ref, *, reduce_sum):
    # x_ref:   (tb, F*D) rows in native layout (trailing dim on lanes).
    # sel_ref: (F*D, D) static 0/1 selector, sel[f*D + d, d] = 1.
    # o_ref:   (tb, 1) if reduce_sum else (tb, D).
    x = x_ref[...].astype(jnp.float32)            # exactly one upcast per element
    sel = sel_ref[...]
    # Field reduction per embed-dim on the MXU (idle in this mem-bound kernel):
    #   s[b, d]   = sum_f x[b, f, d]
    #   ssq[b, d] = sum_f x[b, f, d]^2
    s = jnp.dot(x, sel, preferred_element_type=jnp.float32)          # (tb, D)
    ssq = jnp.dot(x * x, sel, preferred_element_type=jnp.float32)    # (tb, D)
    ix = s * s - ssq                                                 # (tb, D)
    if reduce_sum:
        o_ref[...] = (0.5 * jnp.sum(ix, axis=1, keepdims=True)).astype(o_ref.dtype)
    else:
        o_ref[...] = (0.5 * ix).astype(o_ref.dtype)


def _vmem_limit_bytes():
    cap = None
    try:
        cap = getattr(pltpu.get_tpu_info(), "vmem_capacity_bytes", None)
    except Exception:
        cap = None
    if not cap:
        cap = 64 << 20  # conservative: v7x per-TC physical VMEM
    return int(min(cap * 3 // 4, 96 << 20))


def _num_tensorcores():
    try:
        info = pltpu.get_tpu_info()
    except Exception:
        return 1
    for name in ("num_cores", "core_count", "num_tensorcores", "tensor_core_count"):
        v = getattr(info, name, None)
        if isinstance(v, int) and v > 0:
            return v
    return 1


def _choose_row_tile(B, FD, D, out_cols, itemsize, vmem_limit):
    # Per-row VMEM: double-buffered HBM input block + in-kernel f32 temps
    # (cast copy + squared copy) + double-buffered output block.
    per_row = 2 * FD * itemsize + 2 * FD * 4 + 2 * out_cols * itemsize
    fixed = 2 * FD * D * 4 + (4 << 20)            # resident selector (x2) + slack
    avail = max(vmem_limit - fixed, per_row * 8)
    tb = max(8, (avail // per_row) // 8 * 8)
    tb = min(tb, 4096)                            # bound per-step latency
    if tb >= B:
        return B                                  # single full-extent block
    # Prefer >= 2 grid steps per TensorCore (megacore sharding keeps its
    # double-buffering), but never shrink tiles below 256 rows to get there.
    min_steps = 2 * _num_tensorcores()
    while tb > 256 and pl.cdiv(B, tb) < min_steps:
        tb = max(256, (tb // 2) // 8 * 8)
    return tb


def factorization_machine(x, *, reduce_sum=True):
    """x: (B, F, D) array (f32 or bf16). Returns (B, 1) if reduce_sum else (B, D)."""
    B, F, D = x.shape
    FD = F * D
    itemsize = jnp.dtype(x.dtype).itemsize
    out_cols = 1 if reduce_sum else D

    # Native layout: free row-major reshape -> no extra HBM pass.
    x2 = x.reshape(B, FD)
    # Static selector mapping flattened (f, d) column -> d (built once; tiny).
    sel = jnp.tile(jnp.eye(D, dtype=jnp.float32), (F, 1))     # (F*D, D)

    vmem_limit = _vmem_limit_bytes()
    tb = _choose_row_tile(B, FD, D, out_cols, itemsize, vmem_limit)
    grid = (pl.cdiv(B, tb),)

    kernel = functools.partial(_fm_kernel, reduce_sum=reduce_sum)
    cost = pl.CostEstimate(
        flops=4 * B * FD * D + 3 * B * D,
        transcendentals=0,
        bytes_accessed=B * FD * itemsize + FD * D * 4 + B * out_cols * itemsize,
    )

    return pl.pallas_call(
        kernel,
        out_shape=jax.ShapeDtypeStruct((B, out_cols), x.dtype),
        grid=grid,
        in_specs=[
            pl.BlockSpec((tb, FD), lambda b: (b, 0)),
            pl.BlockSpec((FD, D), lambda b: (0, 0)),   # same block every step -> resident
        ],
        out_specs=pl.BlockSpec((tb, out_cols), lambda b: (b, 0)),
        compiler_params=pltpu.CompilerParams(
            dimension_semantics=("parallel",),
            vmem_limit_bytes=vmem_limit,
        ),
        cost_estimate=cost,
    )(x2, sel)


def _reference_fm(x, reduce_sum=True):
    square_of_sum = jnp.sum(x, axis=1) ** 2
    sum_of_square = jnp.sum(x ** 2, axis=1)
    ix = square_of_sum - sum_of_square
    if reduce_sum:
        ix = jnp.sum(ix, axis=1, keepdims=True)
    return 0.5 * ix


if __name__ == "__main__":
    key = jax.random.PRNGKey(0)
    B, F, D = 8, 16, 32  # batch, num_fields, embed_dim (small test shapes)
    x = jax.random.normal(key, (B, F, D), dtype=jnp.float32)

    out = jax.block_until_ready(factorization_machine(x, reduce_sum=True))
    ref = _reference_fm(x, reduce_sum=True)
    assert out.shape == (B, 1), out.shape
    assert jnp.allclose(out, ref, atol=1e-4, rtol=1e-4), (
        f"reduce_sum=True mismatch: max abs err {jnp.max(jnp.abs(out - ref))}")

    out_nr = jax.block_until_ready(factorization_machine(x, reduce_sum=False))
    ref_nr = _reference_fm(x, reduce_sum=False)
    assert out_nr.shape == (B, D), out_nr.shape
    assert jnp.allclose(out_nr, ref_nr, atol=1e-4, rtol=1e-4), (
        f"reduce_sum=False mismatch: max abs err {jnp.max(jnp.abs(out_nr - ref_nr))}")

    print("KERNEL_OK")
</pallas_src>

<mosaic_0001>
module attributes {stable_mosaic.version = 11 : i64} {
  func.func @_fm_kernel(%arg0: i32, %arg1: memref<8x512xf32, #tpu.memory_space<vmem>>, %arg2: memref<512x32xf32, #tpu.memory_space<vmem>>, %arg3: memref<8x1xf32, #tpu.memory_space<vmem>>) attributes {dimension_semantics = [#tpu.dimension_semantics<parallel>], iteration_bounds = array<i64: 1>, scalar_prefetch = 0 : i64, scratch_operands = 0 : i64, tpu.core_type = #tpu.core_type<tc>, window_params = [{transform_indices = @transform_0, window_bounds = array<i64: 8, 512>}, {pipeline_mode = #tpu.pipeline_mode<synchronous>, transform_indices = @transform_1, window_bounds = array<i64: 512, 32>}, {transform_indices = @transform_2, window_bounds = array<i64: 8, 1>}]} {
    %c0 = arith.constant 0 : index
    %c0_0 = arith.constant 0 : index
    %0 = vector.load %arg1[%c0, %c0_0] : memref<8x512xf32, #tpu.memory_space<vmem>>, vector<8x512xf32>
    %c0_1 = arith.constant 0 : index
    %c0_2 = arith.constant 0 : index
    %1 = vector.load %arg2[%c0_1, %c0_2] : memref<512x32xf32, #tpu.memory_space<vmem>>, vector<512x32xf32>
    %cst = arith.constant dense<0.000000e+00> : vector<8x32xf32>
    %2 = tpu.matmul %0, %1, %cst {dimension_numbers = #tpu.dot_dimension_numbers<[1], [0], [0], [1], [0, 0, 1, 1], [], []>} : vector<8x512xf32>, vector<512x32xf32>, vector<8x32xf32> -> vector<8x32xf32>
    %3 = arith.mulf %0, %0 : vector<8x512xf32>
    %cst_3 = arith.constant dense<0.000000e+00> : vector<8x32xf32>
    %4 = tpu.matmul %3, %1, %cst_3 {dimension_numbers = #tpu.dot_dimension_numbers<[1], [0], [0], [1], [0, 0, 1, 1], [], []>} : vector<8x512xf32>, vector<512x32xf32>, vector<8x32xf32> -> vector<8x32xf32>
    %5 = arith.mulf %2, %2 : vector<8x32xf32>
    %6 = arith.subf %5, %4 : vector<8x32xf32>
    %cst_4 = arith.constant dense<0.000000e+00> : vector<8xf32>
    %7 = vector.multi_reduction <add>, %6, %cst_4 [1] : vector<8x32xf32> to vector<8xf32>
    %8 = vector.shape_cast %7 : vector<8xf32> to vector<8x1xf32>
    %cst_5 = arith.constant 5.000000e-01 : f32
    %9 = vector.broadcast %cst_5 : f32 to vector<8x1xf32>
    %10 = arith.mulf %9, %8 : vector<8x1xf32>
    %c0_6 = arith.constant 0 : index
    %c0_7 = arith.constant 0 : index
    %11 = vector.load %arg3[%c0_6, %c0_7] : memref<8x1xf32, #tpu.memory_space<vmem>>, vector<8x1xf32>
    tpu.vector_store %arg3[%c0_6, %c0_7], %10 {strides = array<i32>} : memref<8x1xf32, #tpu.memory_space<vmem>>, vector<8x1xf32>,
    return
  }
  func.func @transform_0(%arg0: i32) -> (i32, i32) {
    %c0_i32 = arith.constant 0 : i32
    %c0_i32_0 = arith.constant 0 : i32
    return %arg0, %c0_i32 : i32, i32
  }
  func.func @transform_1(%arg0: i32) -> (i32, i32) {
    %c0_i32 = arith.constant 0 : i32
    %c0_i32_0 = arith.constant 0 : i32
    %c0_i32_1 = arith.constant 0 : i32
    return %c0_i32, %c0_i32_0 : i32, i32
  }
  func.func @transform_2(%arg0: i32) -> (i32, i32) {
    %c0_i32 = arith.constant 0 : i32
    %c0_i32_0 = arith.constant 0 : i32
    return %arg0, %c0_i32 : i32, i32
  }
}

</mosaic_0001>

<llo_original>
// kernel: tpu_custom_call.1
$region0: #{tpu_custom_call.1}
  #allocation0 [shape = 'u32[]', space=smem, size = 0x4, offset = 0x4, fixed_abs, tag = 'smem constant byte address 0x4 - core index']
  #allocation1 [shape = 'u32[144,128]{1,0:T(1,128)}', space=vmem, size = 0x12000, scoped, tag = 'internal scratch']
  %s0 = inlined_call_operand.vmem [shape: f32[8,512], index: 0, kind: input, shape index: {}]
  %s1 = inlined_call_operand.vmem [shape: f32[512,32], index: 1, kind: input, shape index: {}]
  %s2 = inlined_call_operand.vmem [shape: f32[8,1], index: 2, kind: output, shape index: {}]
  %s3 = sld [smem:[#allocation0]]
  $region18: #{tpu_custom_call.1} parent=0
    _
  %s5 = ssub.s32 1, %s3
  %s6 = scalar_select 0, %s5, %s3
  // Predicated region
  $region2: #{tpu_custom_call.1} parent=0 // pred_check
    _
  $region3: #{tpu_custom_call.1} parent=0 // pred_check_branch
    %8 = sbr.rel (0) target = $region5
  $region4: #{tpu_custom_call.1} parent=0 // pred_region
    _
  $region5: #{tpu_custom_call.1} parent=0 // pred_fallthru
    _
  // Predicated region
  $region6: #{tpu_custom_call.1} parent=0 // pred_check
    _
  $region7: #{tpu_custom_call.1} parent=0 // pred_check_branch
    %10 = sbr.rel (0) target = $region9
  $region8: #{tpu_custom_call.1} parent=0 // pred_region
    _
  $region9: #{tpu_custom_call.1} parent=0 // pred_fallthru
    _
  %v11 = vld [vmem:[%s0] sm:$0xff]
  %v12 = vld [vmem:[%s0 + $0x8] sm:$0xff]
  %v13 = vld [vmem:[%s0 + $0x10] sm:$0xff]
  %v14 = vld [vmem:[%s0 + $0x18] sm:$0xff]
  %v15 = vld [vmem:[%s1] sm:$0xff]
  %v16 = vld [vmem:[%s1 + $0x8] sm:$0xff]
  %v17 = vld [vmem:[%s1 + $0x10] sm:$0xff]
  %v18 = vld [vmem:[%s1 + $0x18] sm:$0xff]
  %v19 = vld [vmem:[%s1 + $0x20] sm:$0xff]
  %v20 = vld [vmem:[%s1 + $0x28] sm:$0xff]
  %v21 = vld [vmem:[%s1 + $0x30] sm:$0xff]
  %v22 = vld [vmem:[%s1 + $0x38] sm:$0xff]
  %v23 = vld [vmem:[%s1 + $0x40] sm:$0xff]
  %v24 = vld [vmem:[%s1 + $0x48] sm:$0xff]
  %v25 = vld [vmem:[%s1 + $0x50] sm:$0xff]
  %v26 = vld [vmem:[%s1 + $0x58] sm:$0xff]
  %v27 = vld [vmem:[%s1 + $0x60] sm:$0xff]
  %v28 = vld [vmem:[%s1 + $0x68] sm:$0xff]
  %v29 = vld [vmem:[%s1 + $0x70] sm:$0xff]
  %v30 = vld [vmem:[%s1 + $0x78] sm:$0xff]
  %v31 = vld [vmem:[%s1 + $0x80] sm:$0xff]
  %v32 = vld [vmem:[%s1 + $0x88] sm:$0xff]
  %v33 = vld [vmem:[%s1 + $0x90] sm:$0xff]
  %v34 = vld [vmem:[%s1 + $0x98] sm:$0xff]
  %v35 = vld [vmem:[%s1 + $0xa0] sm:$0xff]
  %v36 = vld [vmem:[%s1 + $0xa8] sm:$0xff]
  %v37 = vld [vmem:[%s1 + $0xb0] sm:$0xff]
  %v38 = vld [vmem:[%s1 + $0xb8] sm:$0xff]
  %v39 = vld [vmem:[%s1 + $0xc0] sm:$0xff]
  %v40 = vld [vmem:[%s1 + $0xc8] sm:$0xff]
  %v41 = vld [vmem:[%s1 + $0xd0] sm:$0xff]
  %v42 = vld [vmem:[%s1 + $0xd8] sm:$0xff]
  %v43 = vld [vmem:[%s1 + $0xe0] sm:$0xff]
  %v44 = vld [vmem:[%s1 + $0xe8] sm:$0xff]
  %v45 = vld [vmem:[%s1 + $0xf0] sm:$0xff]
  %v46 = vld [vmem:[%s1 + $0xf8] sm:$0xff]
  %v47 = vld [vmem:[%s1 + $0x100] sm:$0xff]
  %v48 = vld [vmem:[%s1 + $0x108] sm:$0xff]
  %v49 = vld [vmem:[%s1 + $0x110] sm:$0xff]
  %v50 = vld [vmem:[%s1 + $0x118] sm:$0xff]
  %v51 = vld [vmem:[%s1 + $0x120] sm:$0xff]
  %v52 = vld [vmem:[%s1 + $0x128] sm:$0xff]
  %v53 = vld [vmem:[%s1 + $0x130] sm:$0xff]
  %v54 = vld [vmem:[%s1 + $0x138] sm:$0xff]
  %v55 = vld [vmem:[%s1 + $0x140] sm:$0xff]
  %v56 = vld [vmem:[%s1 + $0x148] sm:$0xff]
  %v57 = vld [vmem:[%s1 + $0x150] sm:$0xff]
  %v58 = vld [vmem:[%s1 + $0x158] sm:$0xff]
  %v59 = vld [vmem:[%s1 + $0x160] sm:$0xff]
  %v60 = vld [vmem:[%s1 + $0x168] sm:$0xff]
  %v61 = vld [vmem:[%s1 + $0x170] sm:$0xff]
  %v62 = vld [vmem:[%s1 + $0x178] sm:$0xff]
  %v63 = vld [vmem:[%s1 + $0x180] sm:$0xff]
  %v64 = vld [vmem:[%s1 + $0x188] sm:$0xff]
  %v65 = vld [vmem:[%s1 + $0x190] sm:$0xff]
  %v66 = vld [vmem:[%s1 + $0x198] sm:$0xff]
  %v67 = vld [vmem:[%s1 + $0x1a0] sm:$0xff]
  %v68 = vld [vmem:[%s1 + $0x1a8] sm:$0xff]
  %v69 = vld [vmem:[%s1 + $0x1b0] sm:$0xff]
  %v70 = vld [vmem:[%s1 + $0x1b8] sm:$0xff]
  %v71 = vld [vmem:[%s1 + $0x1c0] sm:$0xff]
  %v72 = vld [vmem:[%s1 + $0x1c8] sm:$0xff]
  %v73 = vld [vmem:[%s1 + $0x1d0] sm:$0xff]
  %v74 = vld [vmem:[%s1 + $0x1d8] sm:$0xff]
  %v75 = vld [vmem:[%s1 + $0x1e0] sm:$0xff]
  %v76 = vld [vmem:[%s1 + $0x1e8] sm:$0xff]
  %v77 = vld [vmem:[%s1 + $0x1f0] sm:$0xff]
  %v78 = vld [vmem:[%s1 + $0x1f8] sm:$0xff]
  %79 = vmatprep.subr.mxu0 0.0
  %80 = vmatpush1.msra.mxu0 %v30
  %81 = vmatprep.subr.mxu0 0.0
  %82 = vmatpush1.msra.mxu0 %v29
  %83 = vmatprep.subr.mxu0 0.0
  %84 = vmatpush1.msra.mxu0 %v28
  %85 = vmatprep.subr.mxu0 0.0
  %86 = vmatpush1.msra.mxu0 %v27
  %87 = vmatprep.subr.mxu0 0.0
  %88 = vmatpush1.msra.mxu0 %v26
  %89 = vmatprep.subr.mxu0 0.0
  %90 = vmatpush1.msra.mxu0 %v25
  %91 = vmatprep.subr.mxu0 0.0
  %92 = vmatpush1.msra.mxu0 %v24
  %93 = vmatprep.subr.mxu0 0.0
  %94 = vmatpush1.msra.mxu0 %v23
  %95 = vmatprep.subr.mxu0 0.0
  %96 = vmatpush1.msra.mxu0 %v22
  %97 = vmatprep.subr.mxu0 0.0
  %98 = vmatpush1.msra.mxu0 %v21
  %99 = vmatprep.subr.mxu0 0.0
  %100 = vmatpush1.msra.mxu0 %v20
  %101 = vmatprep.subr.mxu0 0.0
  %102 = vmatpush1.msra.mxu0 %v19
  %103 = vmatprep.subr.mxu0 0.0
  %104 = vmatpush1.msra.mxu0 %v18
  %105 = vmatprep.subr.mxu0 0.0
  %106 = vmatpush1.msra.mxu0 %v17
  %107 = vmatprep.subr.mxu0 0.0
  %108 = vmatpush1.msra.mxu0 %v16
  %109 = vmatprep.subr.mxu0 0.0
  %110 = vmatpush1.msra.mxu0 %v15
  %111 = vmatprep.subr.mxu0 0.0
  %112 = vmatpush2.msra.mxu0 %v46
  %113 = vmatprep.subr.mxu0 0.0
  %114 = vmatpush2.msra.mxu0 %v45
  %115 = vmatprep.subr.mxu0 0.0
  %116 = vmatpush2.msra.mxu0 %v44
  %117 = vmatprep.subr.mxu0 0.0
  %118 = vmatpush2.msra.mxu0 %v43
  %119 = vmatprep.subr.mxu0 0.0
  %120 = vmatpush2.msra.mxu0 %v42
  %121 = vmatprep.subr.mxu0 0.0
  %122 = vmatpush2.msra.mxu0 %v41
  %123 = vmatprep.subr.mxu0 0.0
  %124 = vmatpush2.msra.mxu0 %v40
  %125 = vmatprep.subr.mxu0 0.0
  %126 = vmatpush2.msra.mxu0 %v39
  %127 = vmatprep.subr.mxu0 0.0
  %128 = vmatpush2.msra.mxu0 %v38
  %129 = vmatprep.subr.mxu0 0.0
  %130 = vmatpush2.msra.mxu0 %v37
  %131 = vmatprep.subr.mxu0 0.0
  %132 = vmatpush2.msra.mxu0 %v36
  %133 = vmatprep.subr.mxu0 0.0
  %134 = vmatpush2.msra.mxu0 %v35
  %135 = vmatprep.subr.mxu0 0.0
  %136 = vmatpush2.msra.mxu0 %v34
  %137 = vmatprep.subr.mxu0 0.0
  %138 = vmatpush2.msra.mxu0 %v33
  %139 = vmatprep.subr.mxu0 0.0
  %140 = vmatpush2.msra.mxu0 %v32
  %141 = vmatprep.subr.mxu0 0.0
  %142 = vmatpush2.msra.mxu0 %v31
  %143 = vmatprep.mubr.f32.mxu0 %v12
  %144 = vmatmul.mubr.f32.gmra.mxu0 %v11
  %v145 = vpop.f32.mrf.mxu0
  %v146 = vadd.f32 0.0, %v145
  %v147 = vpop.f32.mrf.mxu0
  %148 = vdwg.mxu0
  %149 = vmatprep.subr.mxu0 0.0
  %150 = vmatpush1.msra.mxu0 %v62
  %151 = vmatprep.subr.mxu0 0.0
  %152 = vmatpush1.msra.mxu0 %v61
  %153 = vmatprep.subr.mxu0 0.0
  %154 = vmatpush1.msra.mxu0 %v60
  %155 = vmatprep.subr.mxu0 0.0
  %156 = vmatpush1.msra.mxu0 %v59
  %157 = vmatprep.subr.mxu0 0.0
  %158 = vmatpush1.msra.mxu0 %v58
  %159 = vmatprep.subr.mxu0 0.0
  %160 = vmatpush1.msra.mxu0 %v57
  %161 = vmatprep.subr.mxu0 0.0
  %162 = vmatpush1.msra.mxu0 %v56
  %163 = vmatprep.subr.mxu0 0.0
  %164 = vmatpush1.msra.mxu0 %v55
  %165 = vmatprep.subr.mxu0 0.0
  %166 = vmatpush1.msra.mxu0 %v54
  %167 = vmatprep.subr.mxu0 0.0
  %168 = vmatpush1.msra.mxu0 %v53
  %169 = vmatprep.subr.mxu0 0.0
  %170 = vmatpush1.msra.mxu0 %v52
  %171 = vmatprep.subr.mxu0 0.0
  %172 = vmatpush1.msra.mxu0 %v51
  %173 = vmatprep.subr.mxu0 0.0
  %174 = vmatpush1.msra.mxu0 %v50
  %175 = vmatprep.subr.mxu0 0.0
  %176 = vmatpush1.msra.mxu0 %v49
  %177 = vmatprep.subr.mxu0 0.0
  %178 = vmatpush1.msra.mxu0 %v48
  %179 = vmatprep.subr.mxu0 0.0
  %180 = vmatpush1.msra.mxu0 %v47
  %181 = vmatprep.subr.mxu0 0.0
  %182 = vmatpush2.msra.mxu0 %v78
  %183 = vmatprep.subr.mxu0 0.0
  %184 = vmatpush2.msra.mxu0 %v77
  %185 = vmatprep.subr.mxu0 0.0
  %186 = vmatpush2.msra.mxu0 %v76
  %187 = vmatprep.subr.mxu0 0.0
  %188 = vmatpush2.msra.mxu0 %v75
  %189 = vmatprep.subr.mxu0 0.0
  %190 = vmatpush2.msra.mxu0 %v74
  %191 = vmatprep.subr.mxu0 0.0
  %192 = vmatpush2.msra.mxu0 %v73
  %193 = vmatprep.subr.mxu0 0.0
  %194 = vmatpush2.msra.mxu0 %v72
  %195 = vmatprep.subr.mxu0 0.0
  %196 = vmatpush2.msra.mxu0 %v71
  %197 = vmatprep.subr.mxu0 0.0
  %198 = vmatpush2.msra.mxu0 %v70
  %199 = vmatprep.subr.mxu0 0.0
  %200 = vmatpush2.msra.mxu0 %v69
  %201 = vmatprep.subr.mxu0 0.0
  %202 = vmatpush2.msra.mxu0 %v68
  %203 = vmatprep.subr.mxu0 0.0
  %204 = vmatpush2.msra.mxu0 %v67
  %205 = vmatprep.subr.mxu0 0.0
  %206 = vmatpush2.msra.mxu0 %v66
  %207 = vmatprep.subr.mxu0 0.0
  %208 = vmatpush2.msra.mxu0 %v65
  %209 = vmatprep.subr.mxu0 0.0
  %210 = vmatpush2.msra.mxu0 %v64
  %211 = vmatprep.subr.mxu0 0.0
  %212 = vmatpush2.msra.mxu0 %v63
  %213 = vmatprep.mubr.f32.mxu0 %v14
  %214 = vmatmul.mubr.f32.gmra.mxu0 %v13
  %v215 = vpop.f32.mrf.mxu0
  %v216 = vadd.f32 %v146, %v215
  %v217 = vpop.f32.mrf.mxu0
  %218 = vdwg.mxu0
  %v219 = vmul.f32 %v11, %v11
  %v220 = vmul.f32 %v12, %v12
  %v221 = vmul.f32 %v13, %v13
  %v222 = vmul.f32 %v14, %v14
  %223 = vmatprep.subr.mxu0 0.0
  %224 = vmatpush1.msra.mxu0 %v30
  %225 = vmatprep.subr.mxu0 0.0
  %226 = vmatpush1.msra.mxu0 %v29
  %227 = vmatprep.subr.mxu0 0.0
  %228 = vmatpush1.msra.mxu0 %v28
  %229 = vmatprep.subr.mxu0 0.0
  %230 = vmatpush1.msra.mxu0 %v27
  %231 = vmatprep.subr.mxu0 0.0
  %232 = vmatpush1.msra.mxu0 %v26
  %233 = vmatprep.subr.mxu0 0.0
  %234 = vmatpush1.msra.mxu0 %v25
  %235 = vmatprep.subr.mxu0 0.0
  %236 = vmatpush1.msra.mxu0 %v24
  %237 = vmatprep.subr.mxu0 0.0
  %238 = vmatpush1.msra.mxu0 %v23
  %239 = vmatprep.subr.mxu0 0.0
  %240 = vmatpush1.msra.mxu0 %v22
  %241 = vmatprep.subr.mxu0 0.0
  %242 = vmatpush1.msra.mxu0 %v21
  %243 = vmatprep.subr.mxu0 0.0
  %244 = vmatpush1.msra.mxu0 %v20
  %245 = vmatprep.subr.mxu0 0.0
  %246 = vmatpush1.msra.mxu0 %v19
  %247 = vmatprep.subr.mxu0 0.0
  %248 = vmatpush1.msra.mxu0 %v18
  %249 = vmatprep.subr.mxu0 0.0
  %250 = vmatpush1.msra.mxu0 %v17
  %251 = vmatprep.subr.mxu0 0.0
  %252 = vmatpush1.msra.mxu0 %v16
  %253 = vmatprep.subr.mxu0 0.0
  %254 = vmatpush1.msra.mxu0 %v15
  %255 = vmatprep.subr.mxu0 0.0
  %256 = vmatpush2.msra.mxu0 %v46
  %257 = vmatprep.subr.mxu0 0.0
  %258 = vmatpush2.msra.mxu0 %v45
  %259 = vmatprep.subr.mxu0 0.0
  %260 = vmatpush2.msra.mxu0 %v44
  %261 = vmatprep.subr.mxu0 0.0
  %262 = vmatpush2.msra.mxu0 %v43
  %263 = vmatprep.subr.mxu0 0.0
  %264 = vmatpush2.msra.mxu0 %v42
  %265 = vmatprep.subr.mxu0 0.0
  %266 = vmatpush2.msra.mxu0 %v41
  %267 = vmatprep.subr.mxu0 0.0
  %268 = vmatpush2.msra.mxu0 %v40
  %269 = vmatprep.subr.mxu0 0.0
  %270 = vmatpush2.msra.mxu0 %v39
  %271 = vmatprep.subr.mxu0 0.0
  %272 = vmatpush2.msra.mxu0 %v38
  %273 = vmatprep.subr.mxu0 0.0
  %274 = vmatpush2.msra.mxu0 %v37
  %275 = vmatprep.subr.mxu0 0.0
  %276 = vmatpush2.msra.mxu0 %v36
  %277 = vmatprep.subr.mxu0 0.0
  %278 = vmatpush2.msra.mxu0 %v35
  %279 = vmatprep.subr.mxu0 0.0
  %280 = vmatpush2.msra.mxu0 %v34
  %281 = vmatprep.subr.mxu0 0.0
  %282 = vmatpush2.msra.mxu0 %v33
  %283 = vmatprep.subr.mxu0 0.0
  %284 = vmatpush2.msra.mxu0 %v32
  %285 = vmatprep.subr.mxu0 0.0
  %286 = vmatpush2.msra.mxu0 %v31
  %287 = vmatprep.mubr.f32.mxu0 %v220
  %288 = vmatmul.mubr.f32.gmra.mxu0 %v219
  %v289 = vpop.f32.mrf.mxu0
  %v290 = vadd.f32 0.0, %v289
  %v291 = vpop.f32.mrf.mxu0
  %292 = vdwg.mxu0
  %293 = vmatprep.subr.mxu0 0.0
  %294 = vmatpush1.msra.mxu0 %v62
  %295 = vmatprep.subr.mxu0 0.0
  %296 = vmatpush1.msra.mxu0 %v61
  %297 = vmatprep.subr.mxu0 0.0
  %298 = vmatpush1.msra.mxu0 %v60
  %299 = vmatprep.subr.mxu0 0.0
  %300 = vmatpush1.msra.mxu0 %v59
  %301 = vmatprep.subr.mxu0 0.0
  %302 = vmatpush1.msra.mxu0 %v58
  %303 = vmatprep.subr.mxu0 0.0
  %304 = vmatpush1.msra.mxu0 %v57
  %305 = vmatprep.subr.mxu0 0.0
  %306 = vmatpush1.msra.mxu0 %v56
  %307 = vmatprep.subr.mxu0 0.0
  %308 = vmatpush1.msra.mxu0 %v55
  %309 = vmatprep.subr.mxu0 0.0
  %310 = vmatpush1.msra.mxu0 %v54
  %311 = vmatprep.subr.mxu0 0.0
  %312 = vmatpush1.msra.mxu0 %v53
  %313 = vmatprep.subr.mxu0 0.0
  %314 = vmatpush1.msra.mxu0 %v52
  %315 = vmatprep.subr.mxu0 0.0
  %316 = vmatpush1.msra.mxu0 %v51
  %317 = vmatprep.subr.mxu0 0.0
  %318 = vmatpush1.msra.mxu0 %v50
  %319 = vmatprep.subr.mxu0 0.0
  %320 = vmatpush1.msra.mxu0 %v49
  %321 = vmatprep.subr.mxu0 0.0
  %322 = vmatpush1.msra.mxu0 %v48
  %323 = vmatprep.subr.mxu0 0.0
  %324 = vmatpush1.msra.mxu0 %v47
  %325 = vmatprep.subr.mxu0 0.0
  %326 = vmatpush2.msra.mxu0 %v78
  %327 = vmatprep.subr.mxu0 0.0
  %328 = vmatpush2.msra.mxu0 %v77
  %329 = vmatprep.subr.mxu0 0.0
  %330 = vmatpush2.msra.mxu0 %v76
  %331 = vmatprep.subr.mxu0 0.0
  %332 = vmatpush2.msra.mxu0 %v75
  %333 = vmatprep.subr.mxu0 0.0
  %334 = vmatpush2.msra.mxu0 %v74
  %335 = vmatprep.subr.mxu0 0.0
  %336 = vmatpush2.msra.mxu0 %v73
  %337 = vmatprep.subr.mxu0 0.0
  %338 = vmatpush2.msra.mxu0 %v72
  %339 = vmatprep.subr.mxu0 0.0
  %340 = vmatpush2.msra.mxu0 %v71
  %341 = vmatprep.subr.mxu0 0.0
  %342 = vmatpush2.msra.mxu0 %v70
  %343 = vmatprep.subr.mxu0 0.0
  %344 = vmatpush2.msra.mxu0 %v69
  %345 = vmatprep.subr.mxu0 0.0
  %346 = vmatpush2.msra.mxu0 %v68
  %347 = vmatprep.subr.mxu0 0.0
  %348 = vmatpush2.msra.mxu0 %v67
  %349 = vmatprep.subr.mxu0 0.0
  %350 = vmatpush2.msra.mxu0 %v66
  %351 = vmatprep.subr.mxu0 0.0
  %352 = vmatpush2.msra.mxu0 %v65
  %353 = vmatprep.subr.mxu0 0.0
  %354 = vmatpush2.msra.mxu0 %v64
  %355 = vmatprep.subr.mxu0 0.0
  %356 = vmatpush2.msra.mxu0 %v63
  %357 = vmatprep.mubr.f32.mxu0 %v222
  %358 = vmatmul.mubr.f32.gmra.mxu0 %v221
  %v359 = vpop.f32.mrf.mxu0
  %v360 = vadd.f32 %v290, %v359
  %v361 = vpop.f32.mrf.mxu0
  %362 = vdwg.mxu0
  %v363 = vmul.f32 %v216, %v216
  %v364 = vsub.f32 %v363, %v360
  %vm365 = vcmask 261120
  %v366 = vsel %vm365, %v364, 0.0
  %367 = vadd.xlane.f32.xlu0 %v366
  %v368 = vpop.xlane.xlu0 %367
  %v369 = vmul.f32 %v368, 0.5
  %vm370 = vcmask 7168
  %371 = vst.msk [vmem:[%s2] sm:$0xff] %vm370, %v369
  // Predicated region
  $region10: #{tpu_custom_call.1} parent=0 // pred_check
    _
  $region11: #{tpu_custom_call.1} parent=0 // pred_check_branch
    %373 = sbr.rel (0) target = $region13
  $region12: #{tpu_custom_call.1} parent=0 // pred_region
    _
  $region13: #{tpu_custom_call.1} parent=0 // pred_fallthru
    _
  // Predicated region
  $region14: #{tpu_custom_call.1} parent=0 // pred_check
    _
  $region15: #{tpu_custom_call.1} parent=0 // pred_check_branch
    %375 = sbr.rel (0) target = $region17
  $region16: #{tpu_custom_call.1} parent=0 // pred_region
    _
  $region17: #{tpu_custom_call.1} parent=0 // pred_fallthru
    _

</llo_original>
